<compile_context>
chip_gen: v6e
topology: v6e:2x2x1
jax: 0.10.0
libtpu: 0.0.40
codegen_flags: <defaults>
</compile_context>

<pallas_src>
import functools

import jax
import jax.numpy as jnp
from jax.experimental import pallas as pl
from jax.experimental.pallas import tpu as pltpu

_LANE = 128
_SUBLANE = 8


def _round_up(n, m):
    return ((n + m - 1) // m) * m


def _vmem_capacity_bytes():
    try:
        return int(pltpu.get_tpu_info().vmem_capacity_bytes)
    except Exception:
        return 64 << 20  # conservative fallback (v7x per-TC VMEM)


def prepare_fcn_params(w1, b1, w2):
    """Lane-pad the hidden dim ONCE (outside the per-step forward).

    Padded hidden columns have zero weight and zero bias -> exact no-op.
    The arms axis is intentionally NOT padded (output writeback stays small).
    """
    dim_context, hidden = w1.shape
    hidden_p = _round_up(hidden, _LANE)
    w1_p = jnp.pad(w1, ((0, 0), (0, hidden_p - hidden)))
    b1_p = jnp.pad(jnp.reshape(b1, (1, hidden)), ((0, 0), (0, hidden_p - hidden)))
    w2_p = jnp.pad(w2, ((0, hidden_p - hidden), (0, 0)))
    return w1_p, b1_p, w2_p


def _fcn_kernel(x_ref, w1_ref, b1_ref, w2_ref, o_ref, *, use_norm: bool,
                bf16_dots: bool):
    x = x_ref[...]
    if x.dtype != jnp.float32:
        x = x.astype(jnp.float32)

    if use_norm:
        # nn.LayerNorm(dim_context, elementwise_affine=False), eps=1e-5,
        # biased variance over the feature (last) axis.
        mean = jnp.mean(x, axis=-1, keepdims=True)
        var = jnp.mean((x - mean) * (x - mean), axis=-1, keepdims=True)
        x = (x - mean) * jax.lax.rsqrt(var + 1e-5)

    w1 = w1_ref[...]
    w2 = w2_ref[...]
    xa = x
    if bf16_dots:  # only enabled for large dim_context; accumulation stays f32
        xa = x.astype(jnp.bfloat16)
        w1 = w1.astype(jnp.bfloat16)
        w2 = w2.astype(jnp.bfloat16)

    # Hidden layer: Linear(dim_context, hidden, bias=True) + LeakyReLU(0.01).
    h = jnp.dot(xa, w1, preferred_element_type=jnp.float32)
    h = h + b1_ref[...]                 # (1, hidden_p) broadcast over batch
    h = jnp.maximum(h, 0.01 * h)        # LeakyReLU, default negative_slope
    if bf16_dots:
        h = h.astype(jnp.bfloat16)

    # Output layer: Linear(hidden, num_arms, bias=False).
    out = jnp.dot(h, w2, preferred_element_type=jnp.float32)
    o_ref[...] = out.astype(o_ref.dtype)


def fcn_forward(x, w1_p, b1_p, w2_p, *, use_norm: bool = False,
                batch_block: int = 2048, bf16_dots=None):
    """FCN forward pass. Expects params pre-padded by `prepare_fcn_params`.

    Small batches: gridless call, everything one VMEM block (no pipeline
    bookkeeping). Large batches: 1-D "parallel" grid over the batch axis with
    weights/bias VMEM-resident and x/out streamed; no host-side padding of x
    or the output.
    """
    batch, dim_context = x.shape
    d_w1, hidden_p = w1_p.shape
    h_w2, num_arms = w2_p.shape
    assert d_w1 == dim_context
    assert hidden_p % _LANE == 0 and h_w2 == hidden_p
    assert b1_p.shape == (1, hidden_p)

    if bf16_dots is None:
        bf16_dots = dim_context >= 512  # only worth it once K grows

    kernel = functools.partial(_fcn_kernel, use_norm=use_norm,
                               bf16_dots=bf16_dots)

    itemsize = 4  # params are f32
    weight_bytes = (w1_p.size + b1_p.size + w2_p.size) * itemsize
    row_bytes = (dim_context + hidden_p + num_arms) * itemsize  # x + h + out
    vmem_cap = _vmem_capacity_bytes()

    flops = 2 * batch * (dim_context * hidden_p + hidden_p * num_arms)
    cost = pl.CostEstimate(
        flops=flops,
        transcendentals=batch if use_norm else 0,
        bytes_accessed=int((batch * (dim_context + num_arms)) * x.dtype.itemsize
                           + weight_bytes),
    )

    # ---- Gridless fast path (single VMEM-resident block, single TC). ----
    gridless_bytes = weight_bytes + batch * row_bytes
    gridless_cap = min(batch_block, 1024)  # bigger batches -> tiled path so
    #                                        v7x megacore can split the grid.
    if batch <= gridless_cap and gridless_bytes <= vmem_cap // 2:
        vmem = pl.BlockSpec(memory_space=pltpu.MemorySpace.VMEM)
        vmem_limit = min(vmem_cap, max(32 << 20, 2 * gridless_bytes))
        return pl.pallas_call(
            kernel,
            out_shape=jax.ShapeDtypeStruct((batch, num_arms), x.dtype),
            in_specs=[vmem, vmem, vmem, vmem],
            out_specs=vmem,
            cost_estimate=cost,
            compiler_params=pltpu.CompilerParams(vmem_limit_bytes=vmem_limit),
        )(x, w1_p, b1_p, w2_p)

    # ---- Batch-tiled path: stream x/out, weights + bias VMEM-resident. ----
    tb = _round_up(min(batch_block, batch), _SUBLANE)

    def tile_bytes(t):
        # resident weights + double-buffered x/out tiles + h intermediate
        return (weight_bytes
                + 2 * t * (dim_context + num_arms) * itemsize
                + t * hidden_p * itemsize)

    budget = min(vmem_cap, max(vmem_cap // 2, 32 << 20))
    while tb > _SUBLANE and tile_bytes(tb) > budget:
        tb = _round_up(tb // 2, _SUBLANE)
    vmem_limit = min(vmem_cap, max(32 << 20, 2 * tile_bytes(tb)))

    # NOTE: last grid block may be ragged; with use_norm=True the garbage tail
    # rows can produce non-finite values internally. This is safe because
    # there is no cross-row reduction and the tail writeback is clipped to
    # `batch`. Do not add a batch-axis reduction here without revisiting this.
    return pl.pallas_call(
        kernel,
        out_shape=jax.ShapeDtypeStruct((batch, num_arms), x.dtype),
        grid=(pl.cdiv(batch, tb),),
        in_specs=[
            pl.BlockSpec((tb, dim_context), lambda i: (i, 0)),
            pl.BlockSpec((dim_context, hidden_p), lambda i: (0, 0)),
            pl.BlockSpec((1, hidden_p), lambda i: (0, 0)),
            pl.BlockSpec((hidden_p, num_arms), lambda i: (0, 0)),
        ],
        out_specs=pl.BlockSpec((tb, num_arms), lambda i: (i, 0)),
        cost_estimate=cost,
        compiler_params=pltpu.CompilerParams(
            dimension_semantics=("parallel",),   # megacore-shard batch on v7x
            vmem_limit_bytes=vmem_limit),
    )(x, w1_p, b1_p, w2_p)


def init_fcn_params(key, num_arms, dim_context, hidden=50, dtype=jnp.float32):
    """Deterministic PyTorch-Linear-style (kaiming-uniform) init."""
    k1, k2, k3 = jax.random.split(key, 3)
    bound1 = 1.0 / jnp.sqrt(dim_context)
    w1 = jax.random.uniform(k1, (dim_context, hidden), dtype,
                            minval=-bound1, maxval=bound1)
    b1 = jax.random.uniform(k2, (1, hidden), dtype,
                            minval=-bound1, maxval=bound1)
    bound2 = 1.0 / jnp.sqrt(hidden)
    w2 = jax.random.uniform(k3, (hidden, num_arms), dtype,
                            minval=-bound2, maxval=bound2)
    return w1, b1, w2


def fcn_reference(x, w1, b1, w2, *, use_norm=False):
    """Pure-JAX reference for correctness checking."""
    x = x.astype(jnp.float32)
    if use_norm:
        mean = jnp.mean(x, axis=-1, keepdims=True)
        var = jnp.mean((x - mean) ** 2, axis=-1, keepdims=True)
        x = (x - mean) * jax.lax.rsqrt(var + 1e-5)
    h = x @ w1 + b1
    h = jnp.where(h > 0, h, 0.01 * h)
    return h @ w2


if __name__ == "__main__":
    key = jax.random.PRNGKey(0)
    k_x, k_p, k_x2, k_x3 = jax.random.split(key, 4)

    # Small bandit-sized problem: batch=8 contexts, dim_context=32,
    # hidden=50 (module default), num_arms=5.
    batch, dim_context, hidden, num_arms = 8, 32, 50, 5

    x = jax.random.normal(k_x, (batch, dim_context), jnp.float32)
    w1, b1, w2 = init_fcn_params(k_p, num_arms, dim_context, hidden)
    w1_p, b1_p, w2_p = prepare_fcn_params(w1, b1, w2)  # pad ONCE, reuse forever

    # Gridless small-batch path (norm=False default).
    out = jax.block_until_ready(fcn_forward(x, w1_p, b1_p, w2_p, use_norm=False))
    ref = fcn_reference(x, w1, b1, w2, use_norm=False)
    assert out.shape == (batch, num_arms)
    assert jnp.allclose(out, ref, atol=1e-5, rtol=1e-5)

    # norm=True path.
    out_n = jax.block_until_ready(fcn_forward(x, w1_p, b1_p, w2_p, use_norm=True))
    ref_n = fcn_reference(x, w1, b1, w2, use_norm=True)
    assert jnp.allclose(out_n, ref_n, atol=1e-5, rtol=1e-5)

    # Batch-tiled path (exact tiling), tiny block size to force the grid.
    x_big = jax.random.normal(k_x2, (24, dim_context), jnp.float32)
    out_t = jax.block_until_ready(
        fcn_forward(x_big, w1_p, b1_p, w2_p, use_norm=False, batch_block=8))
    ref_t = fcn_reference(x_big, w1, b1, w2, use_norm=False)
    assert out_t.shape == (24, num_arms)
    assert jnp.allclose(out_t, ref_t, atol=1e-5, rtol=1e-5)

    # Batch-tiled path with a ragged last block (no host-side padding of x/out).
    x_rag = jax.random.normal(k_x3, (20, dim_context), jnp.float32)
    out_r = jax.block_until_ready(
        fcn_forward(x_rag, w1_p, b1_p, w2_p, use_norm=False, batch_block=8))
    ref_r = fcn_reference(x_rag, w1, b1, w2, use_norm=False)
    assert out_r.shape == (20, num_arms)
    assert jnp.allclose(out_r, ref_r, atol=1e-5, rtol=1e-5)

    print("KERNEL_OK")
</pallas_src>

<mosaic_0001>
module attributes {stable_mosaic.version = 11 : i64} {
  func.func @_fcn_kernel(%arg0: memref<8x32xf32, #tpu.memory_space<vmem>>, %arg1: memref<32x128xf32, #tpu.memory_space<vmem>>, %arg2: memref<1x128xf32, #tpu.memory_space<vmem>>, %arg3: memref<128x5xf32, #tpu.memory_space<vmem>>, %arg4: memref<8x5xf32, #tpu.memory_space<vmem>>) attributes {dimension_semantics = [], scalar_prefetch = 0 : i64, scratch_operands = 0 : i64, tpu.core_type = #tpu.core_type<tc>} {
    %c0 = arith.constant 0 : index
    %c0_0 = arith.constant 0 : index
    %0 = vector.load %arg0[%c0, %c0_0] : memref<8x32xf32, #tpu.memory_space<vmem>>, vector<8x32xf32>
    %c0_1 = arith.constant 0 : index
    %c0_2 = arith.constant 0 : index
    %1 = vector.load %arg1[%c0_1, %c0_2] : memref<32x128xf32, #tpu.memory_space<vmem>>, vector<32x128xf32>
    %c0_3 = arith.constant 0 : index
    %c0_4 = arith.constant 0 : index
    %2 = vector.load %arg3[%c0_3, %c0_4] : memref<128x5xf32, #tpu.memory_space<vmem>>, vector<128x5xf32>
    %cst = arith.constant dense<0.000000e+00> : vector<8x128xf32>
    %3 = tpu.matmul %0, %1, %cst {dimension_numbers = #tpu.dot_dimension_numbers<[1], [0], [0], [1], [0, 0, 1, 1], [], []>} : vector<8x32xf32>, vector<32x128xf32>, vector<8x128xf32> -> vector<8x128xf32>
    %c0_5 = arith.constant 0 : index
    %c0_6 = arith.constant 0 : index
    %4 = vector.load %arg2[%c0_5, %c0_6] : memref<1x128xf32, #tpu.memory_space<vmem>>, vector<1x128xf32>
    %5 = vector.broadcast %4 : vector<1x128xf32> to vector<8x128xf32>
    %6 = arith.addf %3, %5 : vector<8x128xf32>
    %cst_7 = arith.constant 0.00999999977 : f32
    %7 = vector.broadcast %cst_7 : f32 to vector<8x128xf32>
    %8 = arith.mulf %7, %6 : vector<8x128xf32>
    %9 = arith.maximumf %6, %8 : vector<8x128xf32>
    %cst_8 = arith.constant dense<0.000000e+00> : vector<8x5xf32>
    %10 = tpu.matmul %9, %2, %cst_8 {dimension_numbers = #tpu.dot_dimension_numbers<[1], [0], [0], [1], [0, 0, 1, 1], [], []>} : vector<8x128xf32>, vector<128x5xf32>, vector<8x5xf32> -> vector<8x5xf32>
    %c0_9 = arith.constant 0 : index
    %c0_10 = arith.constant 0 : index
    %11 = vector.load %arg4[%c0_9, %c0_10] : memref<8x5xf32, #tpu.memory_space<vmem>>, vector<8x5xf32>
    tpu.vector_store %arg4[%c0_9, %c0_10], %10 {strides = array<i32>} : memref<8x5xf32, #tpu.memory_space<vmem>>, vector<8x5xf32>,
    return
  }
}

</mosaic_0001>

<llo_original>
// kernel: tpu_custom_call.1
$region0: #{tpu_custom_call.1}
  #allocation0 [shape = 'u32[]', space=smem, size = 0x4, offset = 0x4, fixed_abs, tag = 'smem constant byte address 0x4 - core index']
  #allocation1 [shape = 'u32[144,128]{1,0:T(1,128)}', space=vmem, size = 0x12000, scoped, tag = 'internal scratch']
  %s0 = inlined_call_operand.vmem [shape: f32[8,32], index: 0, kind: input, shape index: {}]
  %s1 = inlined_call_operand.vmem [shape: f32[32,128], index: 1, kind: input, shape index: {}]
  %s2 = inlined_call_operand.vmem [shape: f32[1,128], index: 2, kind: input, shape index: {}]
  %s3 = inlined_call_operand.vmem [shape: f32[128,5], index: 3, kind: input, shape index: {}]
  %s4 = inlined_call_operand.hbm [shape: f32[8,5], index: 4, kind: output, shape index: {}]
  %s5 = sld [smem:[#allocation0]]
  $region26: #{tpu_custom_call.1} parent=0
    _
  %s7 = ssub.s32 1, %s5
  %s8 = scalar_select 0, %s7, %s5
  $region1: #{tpu_custom_call.1} parent=0
    #allocation2 [shape = 'u8[4096]{0}', space=vmem, size = 0x1000, scoped, tag = 'output window, operand 0, single buffered']
    #allocation3 [shape = 's32[1]{0}', space=sflag, size = 0x4, scoped, tag = 'scoped memory for tpu_custom_call.1']
    %9 = vsyncpa [#allocation3], 0
    // Predicated region
    $region2: #{tpu_custom_call.1} parent=1 // pred_check
      _
    $region3: #{tpu_custom_call.1} parent=1 // pred_check_branch
      %11 = sbr.rel (0) target = $region5
    $region4: #{tpu_custom_call.1} parent=1 // pred_region
      _
    $region5: #{tpu_custom_call.1} parent=1 // pred_fallthru
      _
    // Predicated region
    $region6: #{tpu_custom_call.1} parent=1 // pred_check
      _
    $region7: #{tpu_custom_call.1} parent=1 // pred_check_branch
      %13 = sbr.rel (0) target = $region9
    $region8: #{tpu_custom_call.1} parent=1 // pred_region
      _
    $region9: #{tpu_custom_call.1} parent=1 // pred_fallthru
      _
    // Predicated region
    $region10: #{tpu_custom_call.1} parent=1 // pred_check
      _
    $region11: #{tpu_custom_call.1} parent=1 // pred_check_branch
      %15 = sbr.rel (0) target = $region13
    $region12: #{tpu_custom_call.1} parent=1 // pred_region
      _
    $region13: #{tpu_custom_call.1} parent=1 // pred_fallthru
      _
    // Predicated region
    $region14: #{tpu_custom_call.1} parent=1 // pred_check
      _
    $region15: #{tpu_custom_call.1} parent=1 // pred_check_branch
      %17 = sbr.rel (0) target = $region17
    $region16: #{tpu_custom_call.1} parent=1 // pred_region
      _
    $region17: #{tpu_custom_call.1} parent=1 // pred_fallthru
      _
    %v18 = vld [vmem:[%s0] sm:$0xff]
    %v19 = vld [vmem:[%s1] sm:$0xff]
    %v20 = vld [vmem:[%s1 + $0x8] sm:$0xff]
    %v21 = vld [vmem:[%s1 + $0x10] sm:$0xff]
    %v22 = vld [vmem:[%s1 + $0x18] sm:$0xff]
    %v23 = vld [vmem:[%s3] sm:$0xff]
    %v24 = vld [vmem:[%s3 + $0x8] sm:$0xff]
    %v25 = vld [vmem:[%s3 + $0x10] sm:$0xff]
    %v26 = vld [vmem:[%s3 + $0x18] sm:$0xff]
    %v27 = vld [vmem:[%s3 + $0x20] sm:$0xff]
    %v28 = vld [vmem:[%s3 + $0x28] sm:$0xff]
    %v29 = vld [vmem:[%s3 + $0x30] sm:$0xff]
    %v30 = vld [vmem:[%s3 + $0x38] sm:$0xff]
    %v31 = vld [vmem:[%s3 + $0x40] sm:$0xff]
    %v32 = vld [vmem:[%s3 + $0x48] sm:$0xff]
    %v33 = vld [vmem:[%s3 + $0x50] sm:$0xff]
    %v34 = vld [vmem:[%s3 + $0x58] sm:$0xff]
    %v35 = vld [vmem:[%s3 + $0x60] sm:$0xff]
    %v36 = vld [vmem:[%s3 + $0x68] sm:$0xff]
    %v37 = vld [vmem:[%s3 + $0x70] sm:$0xff]
    %v38 = vld [vmem:[%s3 + $0x78] sm:$0xff]
    %v39 = vld [vmem:[%s2] sm:$0x1]
    %v41 = vlaneseq
    %v42 = vshrl.u32 %v41, 7
    %v43 = vsub.s32 0, %v42
    %v44 = vrot.slane %v39, %v43
    %vm46 = vcmask 261120
    %v48 = vsel %vm46, %v18, 0
    %50 = vmatprep.subr.mxu0 0.0
    %51 = vmatpush1.msra.mxu0 0.0
    %52 = vmatprep.subr.mxu0 0.0
    %53 = vmatpush1.msra.mxu0 0.0
    %54 = vmatprep.subr.mxu0 0.0
    %55 = vmatpush1.msra.mxu0 0.0
    %56 = vmatprep.subr.mxu0 0.0
    %57 = vmatpush1.msra.mxu0 0.0
    %58 = vmatprep.subr.mxu0 0.0
    %59 = vmatpush1.msra.mxu0 0.0
    %60 = vmatprep.subr.mxu0 0.0
    %61 = vmatpush1.msra.mxu0 0.0
    %62 = vmatprep.subr.mxu0 0.0
    %63 = vmatpush1.msra.mxu0 0.0
    %64 = vmatprep.subr.mxu0 0.0
    %65 = vmatpush1.msra.mxu0 0.0
    %66 = vmatprep.subr.mxu0 0.0
    %67 = vmatpush1.msra.mxu0 0.0
    %68 = vmatprep.subr.mxu0 0.0
    %69 = vmatpush1.msra.mxu0 0.0
    %70 = vmatprep.subr.mxu0 0.0
    %71 = vmatpush1.msra.mxu0 0.0
    %72 = vmatprep.subr.mxu0 0.0
    %73 = vmatpush1.msra.mxu0 0.0
    %74 = vmatprep.subr.mxu0 0.0
    %75 = vmatpush1.msra.mxu0 %v22
    %76 = vmatprep.subr.mxu0 0.0
    %77 = vmatpush1.msra.mxu0 %v21
    %78 = vmatprep.subr.mxu0 0.0
    %79 = vmatpush1.msra.mxu0 %v20
    %80 = vmatprep.subr.mxu0 0.0
    %81 = vmatpush1.msra.mxu0 %v19
    %82 = vmatprep.subr.mxu0 0.0
    %83 = vmatpush2.msra.mxu0 0.0
    %84 = vmatprep.subr.mxu0 0.0
    %85 = vmatpush2.msra.mxu0 0.0
    %86 = vmatprep.subr.mxu0 0.0
    %87 = vmatpush2.msra.mxu0 0.0
    %88 = vmatprep.subr.mxu0 0.0
    %89 = vmatpush2.msra.mxu0 0.0
    %90 = vmatprep.subr.mxu0 0.0
    %91 = vmatpush2.msra.mxu0 0.0
    %92 = vmatprep.subr.mxu0 0.0
    %93 = vmatpush2.msra.mxu0 0.0
    %94 = vmatprep.subr.mxu0 0.0
    %95 = vmatpush2.msra.mxu0 0.0
    %96 = vmatprep.subr.mxu0 0.0
    %97 = vmatpush2.msra.mxu0 0.0
    %98 = vmatprep.subr.mxu0 0.0
    %99 = vmatpush2.msra.mxu0 0.0
    %100 = vmatprep.subr.mxu0 0.0
    %101 = vmatpush2.msra.mxu0 0.0
    %102 = vmatprep.subr.mxu0 0.0
    %103 = vmatpush2.msra.mxu0 0.0
    %104 = vmatprep.subr.mxu0 0.0
    %105 = vmatpush2.msra.mxu0 0.0
    %106 = vmatprep.subr.mxu0 0.0
    %107 = vmatpush2.msra.mxu0 0.0
    %108 = vmatprep.subr.mxu0 0.0
    %109 = vmatpush2.msra.mxu0 0.0
    %110 = vmatprep.subr.mxu0 0.0
    %111 = vmatpush2.msra.mxu0 0.0
    %112 = vmatprep.subr.mxu0 0.0
    %113 = vmatpush2.msra.mxu0 0.0
    %114 = vmatprep.mubr.f32.mxu0 0.0
    %115 = vmatmul.mubr.f32.gmra.mxu0 %v48
    %v116 = vpop.f32.mrf.mxu0
    %v117 = vadd.f32 %v44, %v116
    %v118 = vpop.f32.mrf.mxu0
    %119 = vdwg.mxu0
    %v120 = vmul.f32 %v117, 0.01
    %v121 = vmax.f32 %v117, %v120
    %122 = vmatprep.subr.mxu0 0.0
    %123 = vmatpush1.msra.mxu0 %v38
    %124 = vmatprep.subr.mxu0 0.0
    %125 = vmatpush1.msra.mxu0 %v37
    %126 = vmatprep.subr.mxu0 0.0
    %127 = vmatpush1.msra.mxu0 %v36
    %128 = vmatprep.subr.mxu0 0.0
    %129 = vmatpush1.msra.mxu0 %v35
    %130 = vmatprep.subr.mxu0 0.0
    %131 = vmatpush1.msra.mxu0 %v34
    %132 = vmatprep.subr.mxu0 0.0
    %133 = vmatpush1.msra.mxu0 %v33
    %134 = vmatprep.subr.mxu0 0.0
    %135 = vmatpush1.msra.mxu0 %v32
    %136 = vmatprep.subr.mxu0 0.0
    %137 = vmatpush1.msra.mxu0 %v31
    %138 = vmatprep.subr.mxu0 0.0
    %139 = vmatpush1.msra.mxu0 %v30
    %140 = vmatprep.subr.mxu0 0.0
    %141 = vmatpush1.msra.mxu0 %v29
    %142 = vmatprep.subr.mxu0 0.0
    %143 = vmatpush1.msra.mxu0 %v28
    %144 = vmatprep.subr.mxu0 0.0
    %145 = vmatpush1.msra.mxu0 %v27
    %146 = vmatprep.subr.mxu0 0.0
    %147 = vmatpush1.msra.mxu0 %v26
    %148 = vmatprep.subr.mxu0 0.0
    %149 = vmatpush1.msra.mxu0 %v25
    %150 = vmatprep.subr.mxu0 0.0
    %151 = vmatpush1.msra.mxu0 %v24
    %152 = vmatprep.subr.mxu0 0.0
    %153 = vmatpush1.msra.mxu0 %v23
    %154 = vmatprep.subr.mxu0 0.0
    %155 = vmatpush2.msra.mxu0 0.0
    %156 = vmatprep.subr.mxu0 0.0
    %157 = vmatpush2.msra.mxu0 0.0
    %158 = vmatprep.subr.mxu0 0.0
    %159 = vmatpush2.msra.mxu0 0.0
    %160 = vmatprep.subr.mxu0 0.0
    %161 = vmatpush2.msra.mxu0 0.0
    %162 = vmatprep.subr.mxu0 0.0
    %163 = vmatpush2.msra.mxu0 0.0
    %164 = vmatprep.subr.mxu0 0.0
    %165 = vmatpush2.msra.mxu0 0.0
    %166 = vmatprep.subr.mxu0 0.0
    %167 = vmatpush2.msra.mxu0 0.0
    %168 = vmatprep.subr.mxu0 0.0
    %169 = vmatpush2.msra.mxu0 0.0
    %170 = vmatprep.subr.mxu0 0.0
    %171 = vmatpush2.msra.mxu0 0.0
    %172 = vmatprep.subr.mxu0 0.0
    %173 = vmatpush2.msra.mxu0 0.0
    %174 = vmatprep.subr.mxu0 0.0
    %175 = vmatpush2.msra.mxu0 0.0
    %176 = vmatprep.subr.mxu0 0.0
    %177 = vmatpush2.msra.mxu0 0.0
    %178 = vmatprep.subr.mxu0 0.0
    %179 = vmatpush2.msra.mxu0 0.0
    %180 = vmatprep.subr.mxu0 0.0
    %181 = vmatpush2.msra.mxu0 0.0
    %182 = vmatprep.subr.mxu0 0.0
    %183 = vmatpush2.msra.mxu0 0.0
    %184 = vmatprep.subr.mxu0 0.0
    %185 = vmatpush2.msra.mxu0 0.0
    %186 = vmatprep.mubr.f32.mxu0 0.0
    %187 = vmatmul.mubr.f32.gmra.mxu0 %v121
    %v188 = vpop.f32.mrf.mxu0
    %v189 = vadd.f32 0.0, %v188
    %v190 = vpop.f32.mrf.mxu0
    %191 = vdwg.mxu0
    %vm192 = vcmask 39936
    %193 = vst.msk [vmem:[#allocation2] sm:$0xff] %vm192, %v189
    // Predicated region
    $region18: #{tpu_custom_call.1} parent=1 // pred_check
      _
    $region19: #{tpu_custom_call.1} parent=1 // pred_check_branch
      %195 = sbr.rel (0) target = $region21
    $region20: #{tpu_custom_call.1} parent=1 // pred_region
      %s197 = ssub.s32 128, 128
      %198 = vsyncadd [#allocation3], %s197
      %s200 = sshll.u32 [#allocation2], 4
      %s201 = int_to_ptr.vmem [resolvable:$true] %s200
      %203 = dma.vmem_to_hbm [thread:$0]  %s201, 128, %s4, [#allocation3]
    $region21: #{tpu_custom_call.1} parent=1 // pred_fallthru
      _
    // Predicated region
    $region22: #{tpu_custom_call.1} parent=1 // pred_check
      _
    $region23: #{tpu_custom_call.1} parent=1 // pred_check_branch
      %205 = sbr.rel (0) target = $region25
    $region24: #{tpu_custom_call.1} parent=1 // pred_region
      %206 = dma.done [#allocation3], 128
    $region25: #{tpu_custom_call.1} parent=1 // pred_fallthru
      _
    %207 = vsyncpa [#allocation3], 1

</llo_original>
